<compile_context>
chip_gen: v7x
topology: tpu7x:2x2x1
jax: 0.10.0
libtpu: 0.0.40
codegen_flags: <defaults>
</compile_context>

<pallas_src>
import jax
import jax.numpy as jnp
from jax.experimental import pallas as pl
from jax.experimental.pallas import tpu as pltpu
import numpy as np


def _grouped_rvq_kernel(x_ref, cba_ref, cbg_ref, qout_ref, idx_ref, err_ref,
                        rnorm_ref):
    # x_ref:     (tm, dim)            token tile (groups concatenated on lanes)
    # cba_ref:   (1, G, Dg+1, Cp)     [codebook^T ; -0.5*||c||^2] for layer q
    # cbg_ref:   (1, G, Cp, Dg)       codebook for the one-hot gather, layer q
    # qout_ref:  (tm, dim)            running sum of quantized (resident over q)
    # idx_ref:   (1, G, tm)           code indices for layer q
    # err_ref:   (1, G, tm)           per-row squared error for layer q
    # rnorm_ref: (G, tm)  scratch     carried ||residual||^2 per group
    q = pl.program_id(1)
    _, G, Dg1, Cp = cba_ref.shape
    Dg = Dg1 - 1
    tm, dim = x_ref.shape

    @pl.when(q == 0)
    def _init_acc():
        qout_ref[...] = jnp.zeros_like(qout_ref)

    x = x_ref[...].astype(jnp.float32)       # one lane-dense full-width load
    qacc = qout_ref[...]                     # f32 running sum (zeros at q == 0)
    residual_full = x - qacc                 # residual entering layer q

    @pl.when(q == 0)
    def _init_rnorm():
        # ||x_g||^2 for the first layer; afterwards carried as rnorm_{q+1}=err_q
        for g in range(G):
            r = x[:, g * Dg:(g + 1) * Dg]
            rnorm_ref[g, :] = jnp.sum(r * r, axis=-1)

    lane_iota = jax.lax.broadcasted_iota(jnp.int32, (tm, Cp), 1)
    ones_col = jnp.ones((tm, 1), jnp.float32)
    group_quant = []
    for g in range(G):                       # static; G is small
        residual = residual_full[:, g * Dg:(g + 1) * Dg]          # (tm, Dg)

        # bias folded into the matmul:
        #   [r, 1] @ [[C^T], [-0.5||c||^2]] = <r, c> - 0.5||c||^2
        # argmax of this == argmin of the full euclidean distance.
        r_aug = jnp.concatenate([residual, ones_col],
                                axis=-1).astype(cba_ref.dtype)     # (tm, Dg+1)
        scores = jnp.dot(r_aug, cba_ref[0, g],
                         preferred_element_type=jnp.float32)       # (tm, Cp)

        # argmax with first-occurrence tie-break (matches torch.argmin of dist)
        max_val = jnp.max(scores, axis=-1, keepdims=True)          # (tm, 1)
        cand = jnp.where(scores >= max_val, lane_iota, Cp)         # (tm, Cp)
        idx = jnp.min(cand, axis=-1).astype(jnp.int32)             # (tm,)
        onehot = (cand == idx[:, None]).astype(cbg_ref.dtype)      # reuse cand

        quantized = jnp.dot(onehot, cbg_ref[0, g],
                            preferred_element_type=jnp.float32)    # (tm, Dg)
        group_quant.append(quantized)

        # ||quantized - residual||^2 = ||residual||^2 - 2*max_score
        err = rnorm_ref[g, :] - 2.0 * max_val[:, 0]                # (tm,)
        idx_ref[0, g, :] = idx
        err_ref[0, g, :] = err
        rnorm_ref[g, :] = err                # carried residual norm for layer q+1

    # single lane-dense full-width store per grid step
    qout_ref[...] = qacc + jnp.concatenate(group_quant, axis=-1)


def _vmem_budget_bytes():
    cap = 128 * 1024 * 1024
    try:
        info = pltpu.get_tpu_info()
        cap = int(getattr(info, "vmem_capacity_bytes", cap))
    except Exception:
        pass
    # headroom for Mosaic-internal scratch / pipelining slack (~48 MiB on v7x)
    return (cap * 3) // 4


def _estimate_vmem_bytes(tile_m, dim, G, Cp, Dg, cb_itemsize):
    f32 = 4
    b = 0
    b += 2 * tile_m * dim * f32                     # x block (double-buffered)
    b += 2 * tile_m * dim * f32                     # qout block
    b += 2 * G * (Dg + 1) * Cp * cb_itemsize        # cb_aug per-q block
    b += 2 * G * Cp * Dg * cb_itemsize              # cb_gather per-q block
    b += 2 * 2 * G * tile_m * 4                     # idx + err blocks
    b += G * tile_m * f32                           # rnorm scratch
    # in-kernel temporaries: scores/cand/onehot (tm,Cp) + residual/concat (tm,dim)
    b += 3 * tile_m * Cp * f32 + 3 * tile_m * dim * f32
    return b


def _pick_token_tile(M, dim, G, Cp, Dg, budget, cb_itemsize):
    """Largest lane/sublane-friendly token tile dividing M that fits VMEM."""
    if M < 128:
        return M
    cands = [t for t in (1024, 512, 256, 128) if M % t == 0]
    fits = [t for t in cands
            if _estimate_vmem_bytes(t, dim, G, Cp, Dg, cb_itemsize) <= budget]
    for t in fits:                       # prefer >= 2 tiles (megacore sharding)
        if M // t >= 2:
            return t
    if fits:
        return fits[0]
    if cands:
        return cands[-1]
    return M


def grouped_residual_vq_forward(x, codebooks, *, tile_m=None,
                                use_bf16_matmul=False):
    """x: (B, N, dim) f32;  codebooks: (G, Q, C, Dg) f32.

    Returns (quantized (B,N,dim), all_indices (G,B,N,Q) int32,
             commit_losses (G,1,Q) f32) mirroring GroupedResidualVQ.forward
    with indices=None, return_all_codes=False, eval mode, project_in/out =
    Identity (codebook_dim == dim_per_group).
    """
    B, N, dim = x.shape
    G, Q, C, Dg = codebooks.shape
    assert dim == G * Dg
    M = B * N

    cb_dtype = jnp.bfloat16 if use_bf16_matmul else jnp.float32
    cb_itemsize = 2 if use_bf16_matmul else 4

    # pad codebook-size axis to a lane-dense multiple of 128 (padded codes get
    # a very negative bias so they can never be selected).
    Cp = ((C + 127) // 128) * 128
    pad_c = Cp - C
    NEG = -1e30

    cbf = codebooks.astype(jnp.float32)                          # (G, Q, C, Dg)
    half_sq = 0.5 * jnp.sum(cbf * cbf, axis=-1)                  # (G, Q, C)

    # scores operand: (Q, G, Dg+1, Cp) = [codebook^T ; -0.5*||c||^2]
    cb_t = jnp.transpose(cbf, (1, 0, 3, 2))                      # (Q, G, Dg, C)
    bias = -jnp.transpose(half_sq, (1, 0, 2))[:, :, None, :]     # (Q, G, 1, C)
    cb_t = jnp.pad(cb_t, ((0, 0), (0, 0), (0, 0), (0, pad_c)))
    bias = jnp.pad(bias, ((0, 0), (0, 0), (0, 0), (0, pad_c)),
                   constant_values=NEG)
    cb_aug = jnp.concatenate([cb_t, bias], axis=2).astype(cb_dtype)

    # gather operand: (Q, G, Cp, Dg); padded codes are zero (never selected)
    cb_gather = jnp.pad(jnp.transpose(cbf, (1, 0, 2, 3)),
                        ((0, 0), (0, 0), (0, pad_c), (0, 0))).astype(cb_dtype)

    budget = _vmem_budget_bytes()
    if tile_m is None:
        tile_m = _pick_token_tile(M, dim, G, Cp, Dg, budget, cb_itemsize)
    assert M % tile_m == 0
    assert tile_m == M or tile_m % 128 == 0

    xf = x.reshape(M, dim)
    grid = (M // tile_m, Q)

    qout, idx, sqerr = pl.pallas_call(
        _grouped_rvq_kernel,
        out_shape=(
            jax.ShapeDtypeStruct((M, dim), jnp.float32),
            jax.ShapeDtypeStruct((Q, G, M), jnp.int32),
            jax.ShapeDtypeStruct((Q, G, M), jnp.float32),
        ),
        grid_spec=pltpu.PrefetchScalarGridSpec(
            num_scalar_prefetch=0,
            grid=grid,
            in_specs=[
                pl.BlockSpec((tile_m, dim), lambda i, q: (i, 0)),
                pl.BlockSpec((1, G, Dg + 1, Cp), lambda i, q: (q, 0, 0, 0)),
                pl.BlockSpec((1, G, Cp, Dg), lambda i, q: (q, 0, 0, 0)),
            ],
            out_specs=[
                pl.BlockSpec((tile_m, dim), lambda i, q: (i, 0)),
                pl.BlockSpec((1, G, tile_m), lambda i, q: (q, 0, i)),
                pl.BlockSpec((1, G, tile_m), lambda i, q: (q, 0, i)),
            ],
            scratch_shapes=[pltpu.VMEM((G, tile_m), jnp.float32)],
        ),
        compiler_params=pltpu.CompilerParams(
            dimension_semantics=("parallel", "arbitrary"),
            vmem_limit_bytes=int(budget)),
    )(xf, cb_aug, cb_gather)

    quantized = qout.reshape(B, N, dim)
    all_indices = idx.transpose(1, 2, 0).reshape(G, B, N, Q)
    # per-layer commitment loss = mean squared error over that group's chunk
    commit_losses = (jnp.sum(sqerr, axis=-1).T / float(M * Dg)).reshape(G, 1, Q)
    return quantized, all_indices, commit_losses


def _reference_forward(x, codebooks):
    """Pure-JAX reference of the same eval-mode forward."""
    B, N, dim = x.shape
    G, Q, C, Dg = codebooks.shape
    xg = x.reshape(B, N, G, Dg).transpose(2, 0, 1, 3).reshape(G, B * N, Dg)
    quant_chunks, idx_chunks, loss_chunks = [], [], []
    for g in range(G):
        residual = xg[g]
        q_out = jnp.zeros_like(residual)
        idxs, losses = [], []
        for q in range(Q):
            cb = codebooks[g, q]
            d = (jnp.sum(residual**2, -1, keepdims=True)
                 - 2.0 * residual @ cb.T + jnp.sum(cb**2, -1)[None, :])
            ids = jnp.argmin(d, axis=-1)
            quantized = cb[ids]
            losses.append(jnp.mean((quantized - residual) ** 2))
            idxs.append(ids.astype(jnp.int32))
            q_out = q_out + quantized
            residual = residual - quantized
        quant_chunks.append(q_out)
        idx_chunks.append(jnp.stack(idxs, axis=-1))
        loss_chunks.append(jnp.stack(losses)[None, :])
    quantized = (jnp.stack(quant_chunks).reshape(G, B, N, Dg)
                 .transpose(1, 2, 0, 3).reshape(B, N, dim))
    all_indices = jnp.stack(idx_chunks).reshape(G, B, N, Q)
    commit_losses = jnp.stack(loss_chunks)
    return quantized, all_indices, commit_losses


if __name__ == "__main__":
    # small shapes consistent with GroupedResidualVQ(dim=32, groups=2,
    # num_quantizers=3, codebook_size=64, accept_image_fmap=False)
    B, N, dim = 2, 8, 32
    G, Q, C = 2, 3, 64
    Dg = dim // G

    key = jax.random.PRNGKey(0)
    kx, kc = jax.random.split(key)
    x = jax.random.normal(kx, (B, N, dim), dtype=jnp.float32)
    codebooks = 0.5 * jax.random.normal(kc, (G, Q, C, Dg), dtype=jnp.float32)

    quantized, all_indices, commit_losses = grouped_residual_vq_forward(x, codebooks)
    jax.block_until_ready((quantized, all_indices, commit_losses))

    ref_q, ref_i, ref_l = _reference_forward(x, codebooks)
    np.testing.assert_allclose(np.asarray(quantized), np.asarray(ref_q),
                               rtol=1e-5, atol=1e-5)
    np.testing.assert_array_equal(np.asarray(all_indices), np.asarray(ref_i))
    np.testing.assert_allclose(np.asarray(commit_losses), np.asarray(ref_l),
                               rtol=1e-4, atol=1e-5)
    print("KERNEL_OK")
</pallas_src>

<mosaic_0001>
module attributes {stable_mosaic.version = 11 : i64} {
  func.func @_grouped_rvq_kernel(%arg0: i32, %arg1: i32, %arg2: memref<16x32xf32, #tpu.memory_space<vmem>>, %arg3: memref<1x2x17x128xf32, #tpu.memory_space<vmem>>, %arg4: memref<1x2x128x16xf32, #tpu.memory_space<vmem>>, %arg5: memref<16x32xf32, #tpu.memory_space<vmem>>, %arg6: memref<1x2x16xi32, #tpu.memory_space<vmem>>, %arg7: memref<1x2x16xf32, #tpu.memory_space<vmem>>, %arg8: memref<2x16xf32, #tpu.memory_space<vmem>>) attributes {dimension_semantics = [#tpu.dimension_semantics<parallel>, #tpu.dimension_semantics<arbitrary>], iteration_bounds = array<i64: 1, 3>, scalar_prefetch = 0 : i64, scratch_operands = 1 : i64, tpu.core_type = #tpu.core_type<tc>, window_params = [{transform_indices = @transform_0, window_bounds = array<i64: 16, 32>}, {transform_indices = @transform_1, window_bounds = array<i64: 1, 2, 17, 128>}, {transform_indices = @transform_2, window_bounds = array<i64: 1, 2, 128, 16>}, {transform_indices = @transform_3, window_bounds = array<i64: 16, 32>}, {transform_indices = @transform_4, window_bounds = array<i64: 1, 2, 16>}, {transform_indices = @transform_5, window_bounds = array<i64: 1, 2, 16>}]} {
    %c0_i32 = arith.constant 0 : i32
    %0 = arith.cmpi eq, %arg1, %c0_i32 : i32
    %1 = arith.extui %0 : i1 to i32
    %c0_i32_0 = arith.constant 0 : i32
    %2 = arith.cmpi ne, %1, %c0_i32_0 : i32
    scf.if %2 {
      %cst_54 = arith.constant 0.000000e+00 : f32
      %84 = vector.broadcast %cst_54 : f32 to vector<16x32xf32>
      %c0_55 = arith.constant 0 : index
      %c0_56 = arith.constant 0 : index
      %85 = vector.load %arg5[%c0_55, %c0_56] : memref<16x32xf32, #tpu.memory_space<vmem>>, vector<16x32xf32>
      tpu.vector_store %arg5[%c0_55, %c0_56], %84 {strides = array<i32>} : memref<16x32xf32, #tpu.memory_space<vmem>>, vector<16x32xf32>,
    } else {
    }
    %c0 = arith.constant 0 : index
    %c0_1 = arith.constant 0 : index
    %3 = vector.load %arg2[%c0, %c0_1] : memref<16x32xf32, #tpu.memory_space<vmem>>, vector<16x32xf32>
    %c0_2 = arith.constant 0 : index
    %c0_3 = arith.constant 0 : index
    %4 = vector.load %arg5[%c0_2, %c0_3] : memref<16x32xf32, #tpu.memory_space<vmem>>, vector<16x32xf32>
    %5 = arith.subf %3, %4 : vector<16x32xf32>
    %c0_i32_4 = arith.constant 0 : i32
    %6 = arith.cmpi eq, %arg1, %c0_i32_4 : i32
    %7 = arith.extui %6 : i1 to i32
    %c0_i32_5 = arith.constant 0 : i32
    %8 = arith.cmpi ne, %7, %c0_i32_5 : i32
    scf.if %8 {
      %84 = vector.extract_strided_slice %3 {offsets = [0, 0], sizes = [16, 16], strides = [1, 1]} : vector<16x32xf32> to vector<16x16xf32>
      %85 = arith.mulf %84, %84 : vector<16x16xf32>
      %cst_54 = arith.constant dense<0.000000e+00> : vector<16xf32>
      %86 = vector.multi_reduction <add>, %85, %cst_54 [1] : vector<16x16xf32> to vector<16xf32>
      %c0_55 = arith.constant 0 : index
      %c0_56 = arith.constant 0 : index
      %87 = vector.load %arg8[%c0_55, %c0_56] : memref<2x16xf32, #tpu.memory_space<vmem>>, vector<1x16xf32>
      %88 = vector.shape_cast %87 : vector<1x16xf32> to vector<16xf32>
      %89 = vector.shape_cast %86 : vector<16xf32> to vector<1x16xf32>
      tpu.vector_store %arg8[%c0_55, %c0_56], %89 {strides = array<i32>} : memref<2x16xf32, #tpu.memory_space<vmem>>, vector<1x16xf32>,
      %90 = vector.extract_strided_slice %3 {offsets = [0, 16], sizes = [16, 16], strides = [1, 1]} : vector<16x32xf32> to vector<16x16xf32>
      %91 = arith.mulf %90, %90 : vector<16x16xf32>
      %cst_57 = arith.constant dense<0.000000e+00> : vector<16xf32>
      %92 = vector.multi_reduction <add>, %91, %cst_57 [1] : vector<16x16xf32> to vector<16xf32>
      %c1_58 = arith.constant 1 : index
      %c0_59 = arith.constant 0 : index
      %93 = vector.load %arg8[%c1_58, %c0_59] : memref<2x16xf32, #tpu.memory_space<vmem>>, vector<1x16xf32>
      %94 = vector.shape_cast %93 : vector<1x16xf32> to vector<16xf32>
      %95 = vector.shape_cast %92 : vector<16xf32> to vector<1x16xf32>
      tpu.vector_store %arg8[%c1_58, %c0_59], %95 {strides = array<i32>} : memref<2x16xf32, #tpu.memory_space<vmem>>, vector<1x16xf32>,
    } else {
    }
    %9 = tpu.iota {dimensions = array<i32: 1>} : vector<16x128xi32>
    %cst = arith.constant 1.000000e+00 : f32
    %10 = vector.broadcast %cst : f32 to vector<16x1xf32>
    %11 = vector.extract_strided_slice %5 {offsets = [0, 0], sizes = [16, 16], strides = [1, 1]} : vector<16x32xf32> to vector<16x16xf32>
    %12 = tpu.concatenate %11, %10 in 1 : vector<16x16xf32>, vector<16x1xf32> -> vector<16x17xf32>
    %c0_6 = arith.constant 0 : index
    %c0_7 = arith.constant 0 : index
    %c0_8 = arith.constant 0 : index
    %c0_9 = arith.constant 0 : index
    %13 = vector.load %arg3[%c0_6, %c0_7, %c0_8, %c0_9] : memref<1x2x17x128xf32, #tpu.memory_space<vmem>>, vector<1x1x17x128xf32>
    %14 = vector.shape_cast %13 : vector<1x1x17x128xf32> to vector<17x128xf32>
    %cst_10 = arith.constant dense<0.000000e+00> : vector<16x128xf32>
    %15 = tpu.matmul %12, %14, %cst_10 {dimension_numbers = #tpu.dot_dimension_numbers<[1], [0], [0], [1], [0, 0, 1, 1], [], []>} : vector<16x17xf32>, vector<17x128xf32>, vector<16x128xf32> -> vector<16x128xf32>
    %cst_11 = arith.constant dense<0xFF800000> : vector<16xf32>
    %16 = vector.multi_reduction <maximumf>, %15, %cst_11 [1] : vector<16x128xf32> to vector<16xf32>
    %17 = vector.shape_cast %16 : vector<16xf32> to vector<16x1xf32>
    %18 = vector.broadcast %17 : vector<16x1xf32> to vector<16x128xf32>
    %19 = arith.cmpf oge, %15, %18 : vector<16x128xf32>
    %c128_i32 = arith.constant 128 : i32
    %20 = vector.broadcast %c128_i32 : i32 to vector<16x128xi32>
    %21 = arith.select %19, %9, %20 : vector<16x128xi1>, vector<16x128xi32>
    %cst_12 = arith.constant dense<2147483647> : vector<16xi32>
    %22 = vector.multi_reduction <minsi>, %21, %cst_12 [1] : vector<16x128xi32> to vector<16xi32>
    %23 = vector.shape_cast %22 : vector<16xi32> to vector<16x1xi32>
    %24 = vector.broadcast %23 : vector<16x1xi32> to vector<16x128xi32>
    %25 = arith.cmpi eq, %21, %24 : vector<16x128xi32>
    %26 = arith.extui %25 : vector<16x128xi1> to vector<16x128xi32>
    %27 = arith.sitofp %26 : vector<16x128xi32> to vector<16x128xf32>
    %c0_13 = arith.constant 0 : index
    %c0_14 = arith.constant 0 : index
    %c0_15 = arith.constant 0 : index
    %c0_16 = arith.constant 0 : index
    %28 = vector.load %arg4[%c0_13, %c0_14, %c0_15, %c0_16] : memref<1x2x128x16xf32, #tpu.memory_space<vmem>>, vector<1x1x128x16xf32>
    %29 = vector.shape_cast %28 : vector<1x1x128x16xf32> to vector<128x16xf32>
    %cst_17 = arith.constant dense<0.000000e+00> : vector<16x16xf32>
    %30 = tpu.matmul %27, %29, %cst_17 {dimension_numbers = #tpu.dot_dimension_numbers<[1], [0], [0], [1], [0, 0, 1, 1], [], []>} : vector<16x128xf32>, vector<128x16xf32>, vector<16x16xf32> -> vector<16x16xf32>
    %c0_18 = arith.constant 0 : index
    %c0_19 = arith.constant 0 : index
    %31 = vector.load %arg8[%c0_18, %c0_19] : memref<2x16xf32, #tpu.memory_space<vmem>>, vector<1x16xf32>
    %32 = vector.shape_cast %31 : vector<1x16xf32> to vector<16xf32>
    %33 = vector.shape_cast %17 : vector<16x1xf32> to vector<16xf32>
    %cst_20 = arith.constant 2.000000e+00 : f32
    %34 = vector.broadcast %cst_20 : f32 to vector<16xf32>
    %35 = arith.mulf %34, %33 : vector<16xf32>
    %36 = arith.subf %32, %35 : vector<16xf32>
    %c0_21 = arith.constant 0 : index
    %c0_22 = arith.constant 0 : index
    %c0_23 = arith.constant 0 : index
    %37 = vector.load %arg6[%c0_21, %c0_22, %c0_23] : memref<1x2x16xi32, #tpu.memory_space<vmem>>, vector<1x1x16xi32>
    %38 = vector.shape_cast %37 : vector<1x1x16xi32> to vector<16xi32>
    %39 = vector.shape_cast %22 : vector<16xi32> to vector<1x1x16xi32>
    tpu.vector_store %arg6[%c0_21, %c0_22, %c0_23], %39 {strides = array<i32>} : memref<1x2x16xi32, #tpu.memory_space<vmem>>, vector<1x1x16xi32>,
    %c0_24 = arith.constant 0 : index
    %c0_25 = arith.constant 0 : index
    %c0_26 = arith.constant 0 : index
    %40 = vector.load %arg7[%c0_24, %c0_25, %c0_26] : memref<1x2x16xf32, #tpu.memory_space<vmem>>, vector<1x1x16xf32>
    %41 = vector.shape_cast %40 : vector<1x1x16xf32> to vector<16xf32>
    %42 = vector.shape_cast %36 : vector<16xf32> to vector<1x1x16xf32>
    tpu.vector_store %arg7[%c0_24, %c0_25, %c0_26], %42 {strides = array<i32>} : memref<1x2x16xf32, #tpu.memory_space<vmem>>, vector<1x1x16xf32>,
    %c0_27 = arith.constant 0 : index
    %c0_28 = arith.constant 0 : index
    %43 = vector.load %arg8[%c0_27, %c0_28] : memref<2x16xf32, #tpu.memory_space<vmem>>, vector<1x16xf32>
    %44 = vector.shape_cast %43 : vector<1x16xf32> to vector<16xf32>
    %45 = vector.shape_cast %36 : vector<16xf32> to vector<1x16xf32>
    tpu.vector_store %arg8[%c0_27, %c0_28], %45 {strides = array<i32>} : memref<2x16xf32, #tpu.memory_space<vmem>>, vector<1x16xf32>,
    %46 = vector.extract_strided_slice %5 {offsets = [0, 16], sizes = [16, 16], strides = [1, 1]} : vector<16x32xf32> to vector<16x16xf32>
    %47 = tpu.concatenate %46, %10 in 1 : vector<16x16xf32>, vector<16x1xf32> -> vector<16x17xf32>
    %c0_29 = arith.constant 0 : index
    %c1 = arith.constant 1 : index
    %c0_30 = arith.constant 0 : index
    %c0_31 = arith.constant 0 : index
    %48 = vector.load %arg3[%c0_29, %c1, %c0_30, %c0_31] : memref<1x2x17x128xf32, #tpu.memory_space<vmem>>, vector<1x1x17x128xf32>
    %49 = vector.shape_cast %48 : vector<1x1x17x128xf32> to vector<17x128xf32>
    %cst_32 = arith.constant dense<0.000000e+00> : vector<16x128xf32>
    %50 = tpu.matmul %47, %49, %cst_32 {dimension_numbers = #tpu.dot_dimension_numbers<[1], [0], [0], [1], [0, 0, 1, 1], [], []>} : vector<16x17xf32>, vector<17x128xf32>, vector<16x128xf32> -> vector<16x128xf32>
    %cst_33 = arith.constant dense<0xFF800000> : vector<16xf32>
    %51 = vector.multi_reduction <maximumf>, %50, %cst_33 [1] : vector<16x128xf32> to vector<16xf32>
    %52 = vector.shape_cast %51 : vector<16xf32> to vector<16x1xf32>
    %53 = vector.broadcast %52 : vector<16x1xf32> to vector<16x128xf32>
    %54 = arith.cmpf oge, %50, %53 : vector<16x128xf32>
    %c128_i32_34 = arith.constant 128 : i32
    %55 = vector.broadcast %c128_i32_34 : i32 to vector<16x128xi32>
    %56 = arith.select %54, %9, %55 : vector<16x128xi1>, vector<16x128xi32>
    %cst_35 = arith.constant dense<2147483647> : vector<16xi32>
    %57 = vector.multi_reduction <minsi>, %56, %cst_35 [1] : vector<16x128xi32> to vector<16xi32>
    %58 = vector.shape_cast %57 : vector<16xi32> to vector<16x1xi32>
    %59 = vector.broadcast %58 : vector<16x1xi32> to vector<16x128xi32>
    %60 = arith.cmpi eq, %56, %59 : vector<16x128xi32>
    %61 = arith.extui %60 : vector<16x128xi1> to vector<16x128xi32>
    %62 = arith.sitofp %61 : vector<16x128xi32> to vector<16x128xf32>
    %c0_36 = arith.constant 0 : index
    %c1_37 = arith.constant 1 : index
    %c0_38 = arith.constant 0 : index
    %c0_39 = arith.constant 0 : index
    %63 = vector.load %arg4[%c0_36, %c1_37, %c0_38, %c0_39] : memref<1x2x128x16xf32, #tpu.memory_space<vmem>>, vector<1x1x128x16xf32>
    %64 = vector.shape_cast %63 : vector<1x1x128x16xf32> to vector<128x16xf32>
    %cst_40 = arith.constant dense<0.000000e+00> : vector<16x16xf32>
    %65 = tpu.matmul %62, %64, %cst_40 {dimension_numbers = #tpu.dot_dimension_numbers<[1], [0], [0], [1], [0, 0, 1, 1], [], []>} : vector<16x128xf32>, vector<128x16xf32>, vector<16x16xf32> -> vector<16x16xf32>
    %c1_41 = arith.constant 1 : index
    %c0_42 = arith.constant 0 : index
    %66 = vector.load %arg8[%c1_41, %c0_42] : memref<2x16xf32, #tpu.memory_space<vmem>>, vector<1x16xf32>
    %67 = vector.shape_cast %66 : vector<1x16xf32> to vector<16xf32>
    %68 = vector.shape_cast %52 : vector<16x1xf32> to vector<16xf32>
    %cst_43 = arith.constant 2.000000e+00 : f32
    %69 = vector.broadcast %cst_43 : f32 to vector<16xf32>
    %70 = arith.mulf %69, %68 : vector<16xf32>
    %71 = arith.subf %67, %70 : vector<16xf32>
    %c0_44 = arith.constant 0 : index
    %c1_45 = arith.constant 1 : index
    %c0_46 = arith.constant 0 : index
    %72 = vector.load %arg6[%c0_44, %c1_45, %c0_46] : memref<1x2x16xi32, #tpu.memory_space<vmem>>, vector<1x1x16xi32>
    %73 = vector.shape_cast %72 : vector<1x1x16xi32> to vector<16xi32>
    %74 = vector.shape_cast %57 : vector<16xi32> to vector<1x1x16xi32>
    tpu.vector_store %arg6[%c0_44, %c1_45, %c0_46], %74 {strides = array<i32>} : memref<1x2x16xi32, #tpu.memory_space<vmem>>, vector<1x1x16xi32>,
    %c0_47 = arith.constant 0 : index
    %c1_48 = arith.constant 1 : index
    %c0_49 = arith.constant 0 : index
    %75 = vector.load %arg7[%c0_47, %c1_48, %c0_49] : memref<1x2x16xf32, #tpu.memory_space<vmem>>, vector<1x1x16xf32>
    %76 = vector.shape_cast %75 : vector<1x1x16xf32> to vector<16xf32>
    %77 = vector.shape_cast %71 : vector<16xf32> to vector<1x1x16xf32>
    tpu.vector_store %arg7[%c0_47, %c1_48, %c0_49], %77 {strides = array<i32>} : memref<1x2x16xf32, #tpu.memory_space<vmem>>, vector<1x1x16xf32>,
    %c1_50 = arith.constant 1 : index
    %c0_51 = arith.constant 0 : index
    %78 = vector.load %arg8[%c1_50, %c0_51] : memref<2x16xf32, #tpu.memory_space<vmem>>, vector<1x16xf32>
    %79 = vector.shape_cast %78 : vector<1x16xf32> to vector<16xf32>
    %80 = vector.shape_cast %71 : vector<16xf32> to vector<1x16xf32>
    tpu.vector_store %arg8[%c1_50, %c0_51], %80 {strides = array<i32>} : memref<2x16xf32, #tpu.memory_space<vmem>>, vector<1x16xf32>,
    %81 = tpu.concatenate %30, %65 in 1 : vector<16x16xf32>, vector<16x16xf32> -> vector<16x32xf32>
    %82 = arith.addf %4, %81 : vector<16x32xf32>
    %c0_52 = arith.constant 0 : index
    %c0_53 = arith.constant 0 : index
    %83 = vector.load %arg5[%c0_52, %c0_53] : memref<16x32xf32, #tpu.memory_space<vmem>>, vector<16x32xf32>
    tpu.vector_store %arg5[%c0_52, %c0_53], %82 {strides = array<i32>} : memref<16x32xf32, #tpu.memory_space<vmem>>, vector<16x32xf32>,
    return
  }
  func.func @transform_0(%arg0: i32, %arg1: i32) -> (i32, i32) {
    %c0_i32 = arith.constant 0 : i32
    %c0_i32_0 = arith.constant 0 : i32
    return %arg0, %c0_i32 : i32, i32
  }
  func.func @transform_1(%arg0: i32, %arg1: i32) -> (i32, i32, i32, i32) {
    %c0_i32 = arith.constant 0 : i32
    %c0_i32_0 = arith.constant 0 : i32
    %c0_i32_1 = arith.constant 0 : i32
    %c0_i32_2 = arith.constant 0 : i32
    return %arg1, %c0_i32, %c0_i32_0, %c0_i32_1 : i32, i32, i32, i32
  }
  func.func @transform_2(%arg0: i32, %arg1: i32) -> (i32, i32, i32, i32) {
    %c0_i32 = arith.constant 0 : i32
    %c0_i32_0 = arith.constant 0 : i32
    %c0_i32_1 = arith.constant 0 : i32
    %c0_i32_2 = arith.constant 0 : i32
    return %arg1, %c0_i32, %c0_i32_0, %c0_i32_1 : i32, i32, i32, i32
  }
  func.func @transform_3(%arg0: i32, %arg1: i32) -> (i32, i32) {
    %c0_i32 = arith.constant 0 : i32
    %c0_i32_0 = arith.constant 0 : i32
    return %arg0, %c0_i32 : i32, i32
  }
  func.func @transform_4(%arg0: i32, %arg1: i32) -> (i32, i32, i32) {
    %c0_i32 = arith.constant 0 : i32
    %c0_i32_0 = arith.constant 0 : i32
    return %arg1, %c0_i32, %arg0 : i32, i32, i32
  }
  func.func @transform_5(%arg0: i32, %arg1: i32) -> (i32, i32, i32) {
    %c0_i32 = arith.constant 0 : i32
    %c0_i32_0 = arith.constant 0 : i32
    return %arg1, %c0_i32, %arg0 : i32, i32, i32
  }
}

</mosaic_0001>

<llo_original>
// kernel: tpu_custom_call.1
$region0: #{tpu_custom_call.1}
  #allocation0 [shape = 'u32[]', space=smem, size = 0x4, offset = 0x4, fixed_abs, tag = 'smem constant byte address 0x4 - core index']
  #allocation1 [shape = 'u32[144,128]{1,0:T(1,128)}', space=vmem, size = 0x12000, scoped, tag = 'internal scratch']
  #allocation2 [shape = 'f32[2,16]{1,0:T(2,128)}', space=vmem, size = 0x400, scoped, tag = 'scratch operand']
  %s0 = inlined_call_operand.hbm [shape: f32[16,32], index: 0, kind: input, shape index: {}]
  %s1 = inlined_call_operand.hbm [shape: f32[3,2,17,128], index: 1, kind: input, shape index: {}]
  %s2 = inlined_call_operand.hbm [shape: f32[3,2,128,16], index: 2, kind: input, shape index: {}]
  %s3 = inlined_call_operand.hbm [shape: f32[16,32], index: 3, kind: output, shape index: {0}]
  %s4 = inlined_call_operand.hbm [shape: s32[3,2,16], index: 4, kind: output, shape index: {1}]
  %s5 = inlined_call_operand.hbm [shape: f32[3,2,16], index: 5, kind: output, shape index: {2}]
  %6 = xla_tuple %s3, %s4, %s5
  %s7 = sld [smem:[#allocation0]]
  $region81: #{tpu_custom_call.1} parent=0
    _
  %s9 = ssub.s32 1, %s7
  %s10 = scalar_select 0, %s9, %s7
  $region1: #{tpu_custom_call.1} parent=0
    #allocation3 [shape = 'u8[8192]{0}', space=vmem, size = 0x2000, scoped, tag = 'input window, operand 0, single buffered']
    #allocation4 [shape = 's32[2]{0}', space=sflag, size = 0x8, scoped, tag = 'scoped memory for tpu_custom_call.1']
    #allocation5 [shape = 's32[2]{0}', space=sflag, size = 0x8, scoped, tag = 'scoped memory for tpu_custom_call.1']
    #allocation6 [shape = 'u8[49152]{0}', space=vmem, size = 0xc000, scoped, tag = 'input window, operand 1']
    #allocation7 [shape = 's32[2]{0}', space=sflag, size = 0x8, scoped, tag = 'scoped memory for tpu_custom_call.1']
    #allocation8 [shape = 'u8[262144]{0}', space=vmem, size = 0x40000, scoped, tag = 'input window, operand 2']
    #allocation9 [shape = 'u8[8192]{0}', space=vmem, size = 0x2000, scoped, tag = 'output window, operand 0, single buffered']
    #allocation10 [shape = 'u8[2048]{0}', space=vmem, size = 0x800, scoped, tag = 'output window, operand 1']
    #allocation11 [shape = 's32[2]{0}', space=sflag, size = 0x8, scoped, tag = 'scoped memory for tpu_custom_call.1']
    #allocation12 [shape = 'u8[2048]{0}', space=vmem, size = 0x800, scoped, tag = 'output window, operand 2']
    %11 = vsyncpa [#allocation4], 0
    %12 = vsyncpa [#allocation7], 0
    %s13 = scalar_lea.sflag [#allocation7], 1
    %14 = vsyncpa %s13, 0
    %15 = vsyncpa [#allocation5], 0
    %16 = vsyncpa [#allocation11], 0
    %s17 = scalar_lea.sflag [#allocation11], 1
    %18 = vsyncpa %s17, 0
    loop: start=0, step=1, limit=5
    $region2: #{tpu_custom_call.1} parent=1 // loop_pre_header
      _
    $region3: #{tpu_custom_call.1} parent=1 // loop_header
      %s20 = sphi 0, %s24
      %p21 = scmp.ge.s32.totalorder %s20, 5
      %s27 = sphi 0, %s39
      %s28 = sphi 0, %s35
      %s29 = sphi 0, %s27
      %s30 = sphi 0, %s28
      %s31 = sphi 0, %s29
      %s32 = sphi 0, %s30
      %s42 = sphi 0, %s44
      %s45 = sphi 0, %s42
      %s46 = sphi 0, %s45
      %s62 = sphi 0, %s46
      %s68 = sphi 0, %s70
      %s71 = sphi 0, %s68
      %s72 = sphi 0, %s71
      %s88 = sphi 0, %s72
      %s94 = sphi 0, %s96
      %s97 = sphi 0, %s94
      %s98 = sphi 0, %s97
      %s114 = sphi 0, %s98
      %s120 = sphi 0, %s122
      %s123 = sphi 0, %s120
      %s124 = sphi 0, %s123
      %s140 = sphi 0, %s124
      %s148 = sphi 0, %s150
      %s151 = sphi 0, %s148
      %s152 = sphi 0, %s151
      %s168 = sphi 0, %s152
      %s176 = sphi 0, %s178
      %s179 = sphi 0, %s176
      %s180 = sphi 0, %s179
      %s196 = sphi 0, %s180
    $region4: #{tpu_custom_call.1} parent=1 // loop_header_branch
      %23 = sbr.rel (%p21) target = $region8
    $region5: #{tpu_custom_call.1} parent=1 // loop_body
      %s25 = ssub.s32 %s20, 1
      %s26 = ssub.s32 %s20, 2
      %s33 = sadd.s32 1, %s28
      %p34 = scmp.ge.s32.totalorder %s33, 3
      %s35 = scalar_select %p34, 0, %s33
      %s36 = sadd.s32 1, %s27
      %s37 = scalar_select %p34, %s36, %s27
      %p38 = scmp.ge.s32.totalorder %s37, 1
      %s39 = scalar_select %p38, 0, %s37
      %s40 = ssub.s32 %s27, %s39
      %p41 = scmp.eq.s32.totalorder %s40, 0
      %s43 = sadd.s32 %s42, 1
      %s44 = scalar_select %p41, %s42, %s43
      %p47 = pneg %p41
      %p48 = scmp.eq.s32.totalorder %s20, 2
      %p49 = por %p47, %p48
      %p50 = scmp.ne.s32.totalorder %s42, %s45
      %p51 = scmp.eq.s32.totalorder %s20, 0
      %p52 = por %p50, %p51
      %p53 = scmp.ne.s32.totalorder %s42, %s45
      %p54 = scmp.eq.s32.totalorder %s25, 2
      %p55 = por %p53, %p54
      %p56 = scmp.ne.s32.totalorder %s45, %s46
      %p57 = scmp.eq.s32.totalorder %s25, 0
      %p58 = por %p56, %p57
      %p59 = scmp.ne.s32.totalorder %s45, %s46
      %p60 = scmp.eq.s32.totalorder %s26, 2
      %p61 = por %p59, %p60
      %p63 = scmp.ne.s32.totalorder %s46, %s62
      %p64 = scmp.eq.s32.totalorder %s26, 0
      %p65 = por %p63, %p64
      %s66 = ssub.s32 %s28, %s35
      %p67 = scmp.eq.s32.totalorder %s66, 0
      %s69 = sadd.s32 %s68, 1
      %s70 = scalar_select %p67, %s68, %s69
      %p73 = pneg %p67
      %p74 = scmp.eq.s32.totalorder %s20, 2
      %p75 = por %p73, %p74
      %p76 = scmp.ne.s32.totalorder %s68, %s71
      %p77 = scmp.eq.s32.totalorder %s20, 0
      %p78 = por %p76, %p77
      %p79 = scmp.ne.s32.totalorder %s68, %s71
      %p80 = scmp.eq.s32.totalorder %s25, 2
      %p81 = por %p79, %p80
      %p82 = scmp.ne.s32.totalorder %s71, %s72
      %p83 = scmp.eq.s32.totalorder %s25, 0
      %p84 = por %p82, %p83
      %p85 = scmp.ne.s32.totalorder %s71, %s72
      %p86 = scmp.eq.s32.totalorder %s26, 2
      %p87 = por %p85, %p86
      %p89 = scmp.ne.s32.totalorder %s72, %s88
      %p90 = scmp.eq.s32.totalorder %s26, 0
      %p91 = por %p89, %p90
      %s92 = ssub.s32 %s28, %s35
      %p93 = scmp.eq.s32.totalorder %s92, 0
      %s95 = sadd.s32 %s94, 1
      %s96 = scalar_select %p93, %s94, %s95
      %p99 = pneg %p93
      %p100 = scmp.eq.s32.totalorder %s20, 2
      %p101 = por %p99, %p100
      %p102 = scmp.ne.s32.totalorder %s94, %s97
      %p103 = scmp.eq.s32.totalorder %s20, 0
      %p104 = por %p102, %p103
      %p105 = scmp.ne.s32.totalorder %s94, %s97
      %p106 = scmp.eq.s32.totalorder %s25, 2
      %p107 = por %p105, %p106
      %p108 = scmp.ne.s32.totalorder %s97, %s98
      %p109 = scmp.eq.s32.totalorder %s25, 0
      %p110 = por %p108, %p109
      %p111 = scmp.ne.s32.totalorder %s97, %s98
      %p112 = scmp.eq.s32.totalorder %s26, 2
      %p113 = por %p111, %p112
      %p115 = scmp.ne.s32.totalorder %s98, %s114
      %p116 = scmp.eq.s32.totalorder %s26, 0
      %p117 = por %p115, %p116
      %s118 = ssub.s32 %s27, %s39
      %p119 = scmp.eq.s32.totalorder %s118, 0
      %s121 = sadd.s32 %s120, 1
      %s122 = scalar_select %p119, %s120, %s121
      %p125 = pneg %p119
      %p126 = scmp.eq.s32.totalorder %s20, 2
      %p127 = por %p125, %p126
      %p128 = scmp.ne.s32.totalorder %s120, %s123
      %p129 = scmp.eq.s32.totalorder %s20, 0
      %p130 = por %p128, %p129
      %p131 = scmp.ne.s32.totalorder %s120, %s123
      %p132 = scmp.eq.s32.totalorder %s25, 2
      %p133 = por %p131, %p132
      %p134 = scmp.ne.s32.totalorder %s123, %s124
      %p135 = scmp.eq.s32.totalorder %s25, 0
      %p136 = por %p134, %p135
      %p137 = scmp.ne.s32.totalorder %s123, %s124
      %p138 = scmp.eq.s32.totalorder %s26, 2
      %p139 = por %p137, %p138
      %p141 = scmp.ne.s32.totalorder %s124, %s140
      %p142 = scmp.eq.s32.totalorder %s26, 0
      %p143 = por %p141, %p142
      %s144 = ssub.s32 %s28, %s35
      %s145 = ssub.s32 %s27, %s39
      %s146 = sor.u32 %s144, %s145
      %p147 = scmp.eq.s32.totalorder %s146, 0
      %s149 = sadd.s32 %s148, 1
      %s150 = scalar_select %p147, %s148, %s149
      %p153 = pneg %p147
      %p154 = scmp.eq.s32.totalorder %s20, 2
      %p155 = por %p153, %p154
      %p156 = scmp.ne.s32.totalorder %s148, %s151
      %p157 = scmp.eq.s32.totalorder %s20, 0
      %p158 = por %p156, %p157
      %p159 = scmp.ne.s32.totalorder %s148, %s151
      %p160 = scmp.eq.s32.totalorder %s25, 2
      %p161 = por %p159, %p160
      %p162 = scmp.ne.s32.totalorder %s151, %s152
      %p163 = scmp.eq.s32.totalorder %s25, 0
      %p164 = por %p162, %p163
      %p165 = scmp.ne.s32.totalorder %s151, %s152
      %p166 = scmp.eq.s32.totalorder %s26, 2
      %p167 = por %p165, %p166
      %p169 = scmp.ne.s32.totalorder %s152, %s168
      %p170 = scmp.eq.s32.totalorder %s26, 0
      %p171 = por %p169, %p170
      %s172 = ssub.s32 %s28, %s35
      %s173 = ssub.s32 %s27, %s39
      %s174 = sor.u32 %s172, %s173
      %p175 = scmp.eq.s32.totalorder %s174, 0
      %s177 = sadd.s32 %s176, 1
      %s178 = scalar_select %p175, %s176, %s177
      %p181 = pneg %p175
      %p182 = scmp.eq.s32.totalorder %s20, 2
      %p183 = por %p181, %p182
      %p184 = scmp.ne.s32.totalorder %s176, %s179
      %p185 = scmp.eq.s32.totalorder %s20, 0
      %p186 = por %p184, %p185
      %p187 = scmp.ne.s32.totalorder %s176, %s179
      %p188 = scmp.eq.s32.totalorder %s25, 2
      %p189 = por %p187, %p188
      %p190 = scmp.ne.s32.totalorder %s179, %s180
      %p191 = scmp.eq.s32.totalorder %s25, 0
      %p192 = por %p190, %p191
      %p193 = scmp.ne.s32.totalorder %s179, %s180
      %p194 = scmp.eq.s32.totalorder %s26, 2
      %p195 = por %p193, %p194
      %p197 = scmp.ne.s32.totalorder %s180, %s196
      %p198 = scmp.eq.s32.totalorder %s26, 0
      %p199 = por %p197, %p198
      %p200 = scmp.le.s32.totalorder 1, %s20
      %p201 = scmp.lt.s32.totalorder %s20, 4
      %p202 = pnand %p200, %p201
      %p203 = pneg %p202
      // Predicated region
      $region9: #{tpu_custom_call.1} parent=5 // pred_check
        _
      $region10: #{tpu_custom_call.1} parent=5 // pred_check_branch
        %205 = sbr.rel (%p202) target = $region12
      $region11: #{tpu_custom_call.1} parent=5 // pred_region
        %s206 = ssub.s32 %s20, 1
        // Predicated region
        $region13: #{tpu_custom_call.1} parent=11 // pred_check
          %p207 = pneg %p58
        $region14: #{tpu_custom_call.1} parent=11 // pred_check_branch
          %209 = sbr.rel (%p207) target = $region16
        $region15: #{tpu_custom_call.1} parent=11 // pred_region
          %s210 = smul.u32 2, %s29
          %s212 = ssub.s32 256, 256
          %213 = vsyncadd [#allocation4], %s212
          %s214 = smul.addr %s210, 128
          %s215 = scalar_lea.hbm %s0, %s214
          %s216 = sshll.u32 [#allocation3], 4
          %s217 = int_to_ptr.vmem [resolvable:$true] %s216
          %222 = dma.hbm_to_vmem [thread:$0]  %s215, 256, %s217, [#allocation4], 128, 128, 8
        $region16: #{tpu_custom_call.1} parent=11 // pred_fallthru
          _
      $region12: #{tpu_custom_call.1} parent=5 // pred_fallthru
        _
      %p223 = scmp.lt.s32.totalorder %s20, 3
      // Predicated region
      $region17: #{tpu_custom_call.1} parent=5 // pred_check
        %p224 = pneg %p223
      $region18: #{tpu_custom_call.1} parent=5 // pred_check_branch
        %226 = sbr.rel (%p224) target = $region20
      $region19: #{tpu_custom_call.1} parent=5 // pred_region
        // Predicated region
        $region21: #{tpu_custom_call.1} parent=19 // pred_check
          %p227 = pneg %p78
        $region22: #{tpu_custom_call.1} parent=19 // pred_check_branch
          %229 = sbr.rel (%p227) target = $region24
        $region23: #{tpu_custom_call.1} parent=19 // pred_region
          %s230 = sand.u32 %s20, 1
          %s231 = scalar_lea.sflag [#allocation7], %s230
          %s232 = sand.u32 %s68, 1
          %s233 = smul.addr %s232, 48
          %s234 = scalar_lea.vmem [#allocation6], %s233
          %s236 = ssub.s32 768, 768
          %237 = vsyncadd %s231, %s236
          %s238 = smul.addr %s28, 6
          %s239 = smul.addr %s238, 128
          %s240 = scalar_lea.hbm %s1, %s239
          %s241 = sshll.u32 %s234, 4
          %s242 = int_to_ptr.vmem [resolvable:$true] %s241
          %247 = dma.hbm_to_vmem [thread:$0]  %s240, 768, %s242, %s231, 128, 128, 8
        $region24: #{tpu_custom_call.1} parent=19 // pred_fallthru
          _
        // Predicated region
        $region25: #{tpu_custom_call.1} parent=19 // pred_check
          %p248 = pneg %p104
        $region26: #{tpu_custom_call.1} parent=19 // pred_check_branch
          %250 = sbr.rel (%p248) target = $region28
        $region27: #{tpu_custom_call.1} parent=19 // pred_region
          %s251 = sand.u32 %s20, 1
          %s252 = scalar_lea.sflag [#allocation7], %s251
          %s253 = sand.u32 %s94, 1
          %s254 = smul.addr %s253, 256
          %s255 = scalar_lea.vmem [#allocation8], %s254
          %s257 = ssub.s32 4096, 4096
          %258 = vsyncadd %s252, %s257
          %s259 = smul.addr %s28, 32
          %s260 = smul.addr %s259, 128
          %s261 = scalar_lea.hbm %s2, %s260
          %s262 = sshll.u32 %s255, 4
          %s263 = int_to_ptr.vmem [resolvable:$true] %s262
          %268 = dma.hbm_to_vmem [thread:$0]  %s261, 4096, %s263, %s252, 128, 128, 8
        $region28: #{tpu_custom_call.1} parent=19 // pred_fallthru
          _
      $region20: #{tpu_custom_call.1} parent=5 // pred_fallthru
        _
      %p269 = scmp.le.s32.totalorder 1, %s20
      %p270 = scmp.lt.s32.totalorder %s20, 4
      %p271 = pnand %p269, %p270
      %p272 = pneg %p271
      // Predicated region
      $region29: #{tpu_custom_call.1} parent=5 // pred_check
        _
      $region30: #{tpu_custom_call.1} parent=5 // pred_check_branch
        %274 = sbr.rel (%p271) target = $region32
      $region31: #{tpu_custom_call.1} parent=5 // pred_region
        %s275 = ssub.s32 %s20, 1
        // Predicated region
        $region33: #{tpu_custom_call.1} parent=31 // pred_check
          %p276 = pneg %p58
        $region34: #{tpu_custom_call.1} parent=31 // pred_check_branch
          %278 = sbr.rel (%p276) target = $region36
        $region35: #{tpu_custom_call.1} parent=31 // pred_region
          %279 = dma.done [#allocation4], 256
        $region36: #{tpu_custom_call.1} parent=31 // pred_fallthru
          _
        %s280 = sand.u32 %s25, 1
        %s281 = scalar_lea.sflag [#allocation7], %s280
        %s282 = sand.u32 %s71, 1
        %s283 = smul.addr %s282, 48
        %s284 = scalar_lea.vmem [#allocation6], %s283
        // Predicated region
        $region37: #{tpu_custom_call.1} parent=31 // pred_check
          %p285 = pneg %p84
        $region38: #{tpu_custom_call.1} parent=31 // pred_check_branch
          %287 = sbr.rel (%p285) target = $region40
        $region39: #{tpu_custom_call.1} parent=31 // pred_region
          %288 = dma.done %s281, 768
        $region40: #{tpu_custom_call.1} parent=31 // pred_fallthru
          _
        %s289 = sand.u32 %s25, 1
        %s290 = scalar_lea.sflag [#allocation7], %s289
        %s291 = sand.u32 %s97, 1
        %s292 = smul.addr %s291, 256
        %s293 = scalar_lea.vmem [#allocation8], %s292
        // Predicated region
        $region41: #{tpu_custom_call.1} parent=31 // pred_check
          %p294 = pneg %p110
        $region42: #{tpu_custom_call.1} parent=31 // pred_check_branch
          %296 = sbr.rel (%p294) target = $region44
        $region43: #{tpu_custom_call.1} parent=31 // pred_region
          %297 = dma.done %s290, 4096
        $region44: #{tpu_custom_call.1} parent=31 // pred_fallthru
          _
        %p298 = pneg %p58
        %p299 = pneg %p55
        %s300 = sand.u32 %s25, 1
        %s301 = scalar_lea.sflag [#allocation7], %s300
        %s302 = sand.u32 %s71, 1
        %s303 = smul.addr %s302, 48
        %s304 = scalar_lea.vmem [#allocation6], %s303
        %p305 = pneg %p84
        %p306 = pneg %p81
        %s307 = sand.u32 %s25, 1
        %s308 = scalar_lea.sflag [#allocation7], %s307
        %s309 = sand.u32 %s97, 1
        %s310 = smul.addr %s309, 256
        %s311 = scalar_lea.vmem [#allocation8], %s310
        %p312 = pneg %p110
        %p313 = pneg %p107
        %p314 = pneg %p136
        %p315 = pneg %p133
        %p316 = pneg %p164
        %p317 = pneg %p161
        %s318 = sand.u32 %s25, 1
        %s319 = scalar_lea.sflag [#allocation11], %s318
        %s320 = sand.u32 %s151, 1
        %s321 = smul.addr %s320, 2
        %s322 = scalar_lea.vmem [#allocation10], %s321
        %p323 = pneg %p192
        %p324 = pneg %p189
        %s325 = sand.u32 %s25, 1
        %s326 = scalar_lea.sflag [#allocation11], %s325
        %s327 = sand.u32 %s179, 1
        %s328 = smul.addr %s327, 2
        %s329 = scalar_lea.vmem [#allocation12], %s328
        %s330 = smul.u32 2, %s29
        %s331 = smul.u32 2, %s29
        %p332 = scmp.eq.s32.totalorder %s30, 0
        // Predicated region
        $region45: #{tpu_custom_call.1} parent=31 // pred_check
          %p333 = pneg %p332
        $region46: #{tpu_custom_call.1} parent=31 // pred_check_branch
          %335 = sbr.rel (%p333) target = $region48
        $region47: #{tpu_custom_call.1} parent=31 // pred_region
          %vm336 = vcmask 261120
          %337 = vst.msk [vmem:[#allocation9] sm:$0xff] %vm336, 0.0
          %338 = vst.msk [vmem:[#allocation9 + $0x8] sm:$0xff] %vm336, 0.0
        $region48: #{tpu_custom_call.1} parent=31 // pred_fallthru
          _
        %v339 = vld [vmem:[#allocation3] sm:$0xff]
        %v340 = vld [vmem:[#allocation3 + $0x8] sm:$0xff]
        %v341 = vld [vmem:[#allocation9] sm:$0xff]
        %v342 = vld [vmem:[#allocation9 + $0x8] sm:$0xff]
        %v343 = vsub.f32 %v339, %v341
        %v344 = vsub.f32 %v340, %v342
        // Predicated region
        $region49: #{tpu_custom_call.1} parent=31 // pred_check
          %p345 = pneg %p332
        $region50: #{tpu_custom_call.1} parent=31 // pred_check_branch
          %347 = sbr.rel (%p345) target = $region52
        $region51: #{tpu_custom_call.1} parent=31 // pred_region
          %v348 = vmul.f32 %v339, %v339
          %v349 = vmul.f32 %v340, %v340
          %vm350 = vcmask 130048
          %v351 = vsel %vm350, %v348, 0.0
          %352 = vadd.xlane.f32.xlu0 %v351
          %v353 = vpop.xlane.xlu0 %352
          %v354 = vsel %vm350, %v349, 0.0
          %355 = vadd.xlane.f32.xlu0 %v354
          %v356 = vpop.xlane.xlu0 %355
          %v359 = vlaneseq
          %v360 = vand.u32 %v359, 127
          %v361 = vlaneseq
          %v362 = vshrl.u32 %v361, 7
          %v363 = vsub.s32 %v360, %v362
          %v364 = vrot.slane %v353, %v363
          %v365 = vadd.s32 %v360, 4294967288
          %v366 = vlaneseq
          %v367 = vshrl.u32 %v366, 7
          %v368 = vsub.s32 %v365, %v367
          %v369 = vrot.slane %v356, %v368
          %vm370 = vcmask 130112
          %v371 = vsel %vm370, %v369, %v364
          %vm373 = vcmask 122880
          %374 = vst.msk [vmem:[#allocation2] sm:$0x1] %vm373, %v371
          %377 = vrot.lane.b32.xlu0 %v348, 112
          %v378 = vpop.permute.xlu0 %377
          %379 = vrot.lane.b32.xlu0 %v349, 112
          %v380 = vpop.permute.xlu0 %379
          %v383 = vsel %vm350, %v378, 0.0
          %384 = vadd.xlane.f32.xlu0 %v383
          %v385 = vpop.xlane.xlu0 %384
          %v386 = vsel %vm350, %v380, 0.0
          %387 = vadd.xlane.f32.xlu0 %v386
          %v388 = vpop.xlane.xlu0 %387
          %v391 = vlaneseq
          %v392 = vshrl.u32 %v391, 7
          %v393 = vsub.s32 %v360, %v392
          %v394 = vrot.slane %v385, %v393
          %v395 = vlaneseq
          %v396 = vshrl.u32 %v395, 7
          %v397 = vsub.s32 %v365, %v396
          %v398 = vrot.slane %v388, %v397
          %v399 = vsel %vm370, %v398, %v394
          %401 = vst.msk [vmem:[#allocation2 + $0x1] sm:$0x1] %vm373, %v399
        $region52: #{tpu_custom_call.1} parent=31 // pred_fallthru
          _
        %v402 = vlaneseq
        %v403 = vand.u32 %v402, 127
        %vm404 = vcmask 130048
        %v405 = vsel %vm404, %v343, 1.0
        %v406 = vsel %vm404, %v344, 1.0
        %v407 = vld [vmem:[%s284] sm:$0xff]
        %v408 = vld [vmem:[%s284 + $0x8] sm:$0xff]
        %v409 = vld [vmem:[%s284 + $0x10] sm:$0x1]
        %vm410 = vcmask 138240
        %v412 = vsel %vm410, %v405, 0
        %v415 = vsel %vm410, %v406, 0
        %vm417 = vcmask 1040384
        %v419 = vsel %vm417, %v409, 0
        %421 = vmatprep.subr.mxu0 0.0
        %422 = vmatpush1.msra.mxu0 %v407
        %423 = vmatprep.subr.mxu0 0.0
        %424 = vmatpush1.msra.mxu0 %v408
        %425 = vmatprep.subr.mxu0 0.0
        %426 = vmatpush1.msra.mxu0 %v419
        %427 = vmatprep.subr.mxu0 0.0
        %428 = vmatpush1.msra.mxu0 0.0
        %429 = vmatprep.subr.mxu0 0.0
        %430 = vmatpush1.msra.mxu0 0.0
        %431 = vmatprep.subr.mxu0 0.0
        %432 = vmatpush1.msra.mxu0 0.0
        %433 = vmatprep.subr.mxu0 0.0
        %434 = vmatpush1.msra.mxu0 0.0
        %435 = vmatprep.subr.mxu0 0.0
        %436 = vmatpush1.msra.mxu0 0.0
        %437 = vmatprep.subr.mxu0 0.0
        %438 = vmatpush1.msra.mxu0 0.0
        %439 = vmatprep.subr.mxu0 0.0
        %440 = vmatpush1.msra.mxu0 0.0
        %441 = vmatprep.subr.mxu0 0.0
        %442 = vmatpush1.msra.mxu0 0.0
        %443 = vmatprep.subr.mxu0 0.0
        %444 = vmatpush1.msra.mxu0 0.0
        %445 = vmatprep.subr.mxu0 0.0
        %446 = vmatpush1.msra.mxu0 0.0
        %447 = vmatprep.subr.mxu0 0.0
        %448 = vmatpush1.msra.mxu0 0.0
        %449 = vmatprep.subr.mxu0 0.0
        %450 = vmatpush1.msra.mxu0 0.0
        %451 = vmatprep.subr.mxu0 0.0
        %452 = vmatpush1.msra.mxu0 0.0
        %453 = vmatprep.subr.mxu0 0.0
        %454 = vmatpush1.msra.mxu0 0.0
        %455 = vmatprep.subr.mxu0 0.0
        %456 = vmatpush1.msra.mxu0 0.0
        %457 = vmatprep.subr.mxu0 0.0
        %458 = vmatpush1.msra.mxu0 0.0
        %459 = vmatprep.subr.mxu0 0.0
        %460 = vmatpush1.msra.mxu0 0.0
        %461 = vmatprep.subr.mxu0 0.0
        %462 = vmatpush1.msra.mxu0 0.0
        %463 = vmatprep.subr.mxu0 0.0
        %464 = vmatpush1.msra.mxu0 0.0
        %465 = vmatprep.subr.mxu0 0.0
        %466 = vmatpush1.msra.mxu0 0.0
        %467 = vmatprep.subr.mxu0 0.0
        %468 = vmatpush1.msra.mxu0 0.0
        %469 = vmatprep.subr.mxu0 0.0
        %470 = vmatpush1.msra.mxu0 0.0
        %471 = vmatprep.subr.mxu0 0.0
        %472 = vmatpush1.msra.mxu0 0.0
        %473 = vmatprep.subr.mxu0 0.0
        %474 = vmatpush1.msra.mxu0 0.0
        %475 = vmatprep.subr.mxu0 0.0
        %476 = vmatpush1.msra.mxu0 0.0
        %477 = vmatprep.subr.mxu0 0.0
        %478 = vmatpush1.msra.mxu0 0.0
        %479 = vmatprep.subr.mxu0 0.0
        %480 = vmatpush1.msra.mxu0 0.0
        %481 = vmatprep.subr.mxu0 0.0
        %482 = vmatpush1.msra.mxu0 0.0
        %483 = vmatprep.subr.mxu0 0.0
        %484 = vmatpush1.msra.mxu0 0.0
        %485 = vmatprep.mubr.f32.mxu0 0.0
        %486 = vmatmul.mubr.f32.gmra.mrb[0].mxu0 %v412
        %v487 = vpop.f32.mrb[0].mxu0
        %v488 = vadd.f32 0.0, %v487
        %v489 = vpop.f32.mrb[0].mxu0
        %490 = vmatprep.mubr.f32.mxu0 0.0
        %491 = vmatmul.mubr.f32.gmra.mrb[0].mxu0 %v415
        %v492 = vpop.f32.mrb[0].mxu0
        %v493 = vadd.f32 0.0, %v492
        %v494 = vpop.f32.mrb[0].mxu0
        %495 = vdwg.mxu0
        %496 = vmax.xlane.f32.xlu0 %v488
        %v497 = vpop.xlane.xlu0 %496
        %498 = vmax.xlane.f32.xlu0 %v493
        %v499 = vpop.xlane.xlu0 %498
        %vm500 = vcmp.ge.f32.partialorder %v488, %v497
        %vm501 = vcmp.ge.f32.partialorder %v493, %v499
        %v502 = vsel %vm500, %v403, 128
        %v503 = vsel %vm501, %v403, 128
        %v504 = vand.u32 %v502, 65535
        %v505 = vshra.s32 %v502, 16
        %v506 = vcvt.s32.f32 %v504
        %v507 = vcvt.s32.f32 %v505
        %508 = vmin.xlane.f32.xlu0 %v507
        %v509 = vpop.xlane.xlu0 %508
        %vm510 = vcmp.eq.f32.partialorder %v507, %v509
        %v511 = vsel %vm510, %v506, inf
        %512 = vmin.xlane.f32.xlu0 %v511
        %v513 = vpop.xlane.xlu0 %512
        %v514 = vcvt.f32.s32 %v513
        %v515 = vcvt.f32.s32 %v509
        %v516 = vshll.u32 %v515, 16
        %v517 = vadd.s32 %v516, %v514
        %v518 = vand.u32 %v503, 65535
        %v519 = vshra.s32 %v503, 16
        %v520 = vcvt.s32.f32 %v518
        %v521 = vcvt.s32.f32 %v519
        %522 = vmin.xlane.f32.xlu0 %v521
        %v523 = vpop.xlane.xlu0 %522
        %vm524 = vcmp.eq.f32.partialorder %v521, %v523
        %v525 = vsel %vm524, %v520, inf
        %526 = vmin.xlane.f32.xlu0 %v525
        %v527 = vpop.xlane.xlu0 %526
        %v528 = vcvt.f32.s32 %v527
        %v529 = vcvt.f32.s32 %v523
        %v530 = vshll.u32 %v529, 16
        %v531 = vadd.s32 %v530, %v528
        %vm532 = vcmp.eq.s32.totalorder %v502, %v517
        %vm533 = vcmp.eq.s32.totalorder %v503, %v531
        %v534 = vsel %vm532, 1, 0
        %v535 = vsel %vm533, 1, 0
        %v536 = vcvt.s32.f32 %v534
        %v537 = vcvt.s32.f32 %v535
        %v538 = vld [vmem:[%s293] sm:$0xff]
        %v539 = vld [vmem:[%s293 + $0x8] sm:$0xff]
        %v540 = vld [vmem:[%s293 + $0x10] sm:$0xff]
        %v541 = vld [vmem:[%s293 + $0x18] sm:$0xff]
        %v542 = vld [vmem:[%s293 + $0x20] sm:$0xff]
        %v543 = vld [vmem:[%s293 + $0x28] sm:$0xff]
        %v544 = vld [vmem:[%s293 + $0x30] sm:$0xff]
        %v545 = vld [vmem:[%s293 + $0x38] sm:$0xff]
        %v546 = vld [vmem:[%s293 + $0x40] sm:$0xff]
        %v547 = vld [vmem:[%s293 + $0x48] sm:$0xff]
        %v548 = vld [vmem:[%s293 + $0x50] sm:$0xff]
        %v549 = vld [vmem:[%s293 + $0x58] sm:$0xff]
        %v550 = vld [vmem:[%s293 + $0x60] sm:$0xff]
        %v551 = vld [vmem:[%s293 + $0x68] sm:$0xff]
        %v552 = vld [vmem:[%s293 + $0x70] sm:$0xff]
        %v553 = vld [vmem:[%s293 + $0x78] sm:$0xff]
        %554 = vmatprep.subr.mxu0 0.0
        %555 = vmatpush1.msra.mxu0 %v538
        %556 = vmatprep.subr.mxu0 0.0
        %557 = vmatpush1.msra.mxu0 %v539
        %558 = vmatprep.subr.mxu0 0.0
        %559 = vmatpush1.msra.mxu0 %v540
        %560 = vmatprep.subr.mxu0 0.0
        %561 = vmatpush1.msra.mxu0 %v541
        %562 = vmatprep.subr.mxu0 0.0
        %563 = vmatpush1.msra.mxu0 %v542
        %564 = vmatprep.subr.mxu0 0.0
        %565 = vmatpush1.msra.mxu0 %v543
        %566 = vmatprep.subr.mxu0 0.0
        %567 = vmatpush1.msra.mxu0 %v544
        %568 = vmatprep.subr.mxu0 0.0
        %569 = vmatpush1.msra.mxu0 %v545
        %570 = vmatprep.subr.mxu0 0.0
        %571 = vmatpush1.msra.mxu0 %v546
        %572 = vmatprep.subr.mxu0 0.0
        %573 = vmatpush1.msra.mxu0 %v547
        %574 = vmatprep.subr.mxu0 0.0
        %575 = vmatpush1.msra.mxu0 %v548
        %576 = vmatprep.subr.mxu0 0.0
        %577 = vmatpush1.msra.mxu0 %v549
        %578 = vmatprep.subr.mxu0 0.0
        %579 = vmatpush1.msra.mxu0 %v550
        %580 = vmatprep.subr.mxu0 0.0
        %581 = vmatpush1.msra.mxu0 %v551
        %582 = vmatprep.subr.mxu0 0.0
        %583 = vmatpush1.msra.mxu0 %v552
        %584 = vmatprep.subr.mxu0 0.0
        %585 = vmatpush1.msra.mxu0 %v553
        %586 = vmatprep.subr.mxu0 0.0
        %587 = vmatpush1.msra.mxu0 0.0
        %588 = vmatprep.subr.mxu0 0.0
        %589 = vmatpush1.msra.mxu0 0.0
        %590 = vmatprep.subr.mxu0 0.0
        %591 = vmatpush1.msra.mxu0 0.0
        %592 = vmatprep.subr.mxu0 0.0
        %593 = vmatpush1.msra.mxu0 0.0
        %594 = vmatprep.subr.mxu0 0.0
        %595 = vmatpush1.msra.mxu0 0.0
        %596 = vmatprep.subr.mxu0 0.0
        %597 = vmatpush1.msra.mxu0 0.0
        %598 = vmatprep.subr.mxu0 0.0
        %599 = vmatpush1.msra.mxu0 0.0
        %600 = vmatprep.subr.mxu0 0.0
        %601 = vmatpush1.msra.mxu0 0.0
        %602 = vmatprep.subr.mxu0 0.0
        %603 = vmatpush1.msra.mxu0 0.0
        %604 = vmatprep.subr.mxu0 0.0
        %605 = vmatpush1.msra.mxu0 0.0
        %606 = vmatprep.subr.mxu0 0.0
        %607 = vmatpush1.msra.mxu0 0.0
        %608 = vmatprep.subr.mxu0 0.0
        %609 = vmatpush1.msra.mxu0 0.0
        %610 = vmatprep.subr.mxu0 0.0
        %611 = vmatpush1.msra.mxu0 0.0
        %612 = vmatprep.subr.mxu0 0.0
        %613 = vmatpush1.msra.mxu0 0.0
        %614 = vmatprep.subr.mxu0 0.0
        %615 = vmatpush1.msra.mxu0 0.0
        %616 = vmatprep.subr.mxu0 0.0
        %617 = vmatpush1.msra.mxu0 0.0
        %618 = vmatprep.mubr.f32.mxu0 0.0
        %619 = vmatmul.mubr.f32.gmra.mrb[0].mxu0 %v536
        %v620 = vpop.f32.mrb[0].mxu0
        %v621 = vadd.f32 0.0, %v620
        %v622 = vpop.f32.mrb[0].mxu0
        %623 = vmatprep.mubr.f32.mxu0 0.0
        %624 = vmatmul.mubr.f32.gmra.mrb[0].mxu0 %v537
        %v625 = vpop.f32.mrb[0].mxu0
        %v626 = vadd.f32 0.0, %v625
        %v627 = vpop.f32.mrb[0].mxu0
        %628 = vdwg.mxu0
        %v629 = vld [vmem:[#allocation2] sm:$0x1]
        %v630 = vmul.f32 %v497, 2.0
        %v631 = vmul.f32 %v499, 2.0
        %v634 = vlaneseq
        %v635 = vshrl.u32 %v634, 7
        %v636 = vsub.s32 %v403, %v635
        %v637 = vrot.slane %v630, %v636
        %v638 = vadd.s32 %v403, 4294967288
        %v639 = vlaneseq
        %v640 = vshrl.u32 %v639, 7
        %v641 = vsub.s32 %v638, %v640
        %v642 = vrot.slane %v631, %v641
        %vm643 = vcmask 130112
        %v644 = vsel %vm643, %v642, %v637
        %v646 = vsub.f32 %v629, %v644
        %v647 = vlaneseq
        %v648 = vshrl.u32 %v647, 7
        %v649 = vsub.s32 %v403, %v648
        %v650 = vrot.slane %v517, %v649
        %v651 = vlaneseq
        %v652 = vshrl.u32 %v651, 7
        %v653 = vsub.s32 %v638, %v652
        %v654 = vrot.slane %v531, %v653
        %v655 = vsel %vm643, %v654, %v650
        %vm656 = vcmask 122880
        %657 = vst.msk [vmem:[%s322] sm:$0x1] %vm656, %v655
        %658 = vst.msk [vmem:[%s329] sm:$0x1] %vm656, %v646
        %659 = vst.msk [vmem:[#allocation2] sm:$0x1] %vm656, %v646
        %662 = vrot.lane.b32.xlu0 %v343, 112
        %v663 = vpop.permute.xlu0 %662
        %664 = vrot.lane.b32.xlu0 %v344, 112
        %v665 = vpop.permute.xlu0 %664
        %v668 = vsel %vm404, %v663, 1.0
        %v669 = vsel %vm404, %v665, 1.0
        %s670 = scalar_lea.vmem %s284, 24 [#allocation6]
        %v671 = vld [vmem:[%s670] sm:$0xff]
        %v672 = vld [vmem:[%s670 + $0x8] sm:$0xff]
        %v673 = vld [vmem:[%s670 + $0x10] sm:$0x1]
        %v675 = vsel %vm410, %v668, 0
        %v678 = vsel %vm410, %v669, 0
        %v681 = vsel %vm417, %v673, 0
        %683 = vmatprep.subr.mxu0 0.0
        %684 = vmatpush1.msra.mxu0 %v671
        %685 = vmatprep.subr.mxu0 0.0
        %686 = vmatpush1.msra.mxu0 %v672
        %687 = vmatprep.subr.mxu0 0.0
        %688 = vmatpush1.msra.mxu0 %v681
        %689 = vmatprep.subr.mxu0 0.0
        %690 = vmatpush1.msra.mxu0 0.0
        %691 = vmatprep.subr.mxu0 0.0
        %692 = vmatpush1.msra.mxu0 0.0
        %693 = vmatprep.subr.mxu0 0.0
        %694 = vmatpush1.msra.mxu0 0.0
        %695 = vmatprep.subr.mxu0 0.0
        %696 = vmatpush1.msra.mxu0 0.0
        %697 = vmatprep.subr.mxu0 0.0
        %698 = vmatpush1.msra.mxu0 0.0
        %699 = vmatprep.subr.mxu0 0.0
        %700 = vmatpush1.msra.mxu0 0.0
        %701 = vmatprep.subr.mxu0 0.0
        %702 = vmatpush1.msra.mxu0 0.0
        %703 = vmatprep.subr.mxu0 0.0
        %704 = vmatpush1.msra.mxu0 0.0
        %705 = vmatprep.subr.mxu0 0.0
        %706 = vmatpush1.msra.mxu0 0.0
        %707 = vmatprep.subr.mxu0 0.0
        %708 = vmatpush1.msra.mxu0 0.0
        %709 = vmatprep.subr.mxu0 0.0
        %710 = vmatpush1.msra.mxu0 0.0
        %711 = vmatprep.subr.mxu0 0.0
        %712 = vmatpush1.msra.mxu0 0.0
        %713 = vmatprep.subr.mxu0 0.0
        %714 = vmatpush1.msra.mxu0 0.0
        %715 = vmatprep.subr.mxu0 0.0
        %716 = vmatpush1.msra.mxu0 0.0
        %717 = vmatprep.subr.mxu0 0.0
        %718 = vmatpush1.msra.mxu0 0.0
        %719 = vmatprep.subr.mxu0 0.0
        %720 = vmatpush1.msra.mxu0 0.0
        %721 = vmatprep.subr.mxu0 0.0
        %722 = vmatpush1.msra.mxu0 0.0
        %723 = vmatprep.subr.mxu0 0.0
        %724 = vmatpush1.msra.mxu0 0.0
        %725 = vmatprep.subr.mxu0 0.0
        %726 = vmatpush1.msra.mxu0 0.0
        %727 = vmatprep.subr.mxu0 0.0
        %728 = vmatpush1.msra.mxu0 0.0
        %729 = vmatprep.subr.mxu0 0.0
        %730 = vmatpush1.msra.mxu0 0.0
        %731 = vmatprep.subr.mxu0 0.0
        %732 = vmatpush1.msra.mxu0 0.0
        %733 = vmatprep.subr.mxu0 0.0
        %734 = vmatpush1.msra.mxu0 0.0
        %735 = vmatprep.subr.mxu0 0.0
        %736 = vmatpush1.msra.mxu0 0.0
        %737 = vmatprep.subr.mxu0 0.0
        %738 = vmatpush1.msra.mxu0 0.0
        %739 = vmatprep.subr.mxu0 0.0
        %740 = vmatpush1.msra.mxu0 0.0
        %741 = vmatprep.subr.mxu0 0.0
        %742 = vmatpush1.msra.mxu0 0.0
        %743 = vmatprep.subr.mxu0 0.0
        %744 = vmatpush1.msra.mxu0 0.0
        %745 = vmatprep.subr.mxu0 0.0
        %746 = vmatpush1.msra.mxu0 0.0
        %747 = vmatprep.mubr.f32.mxu0 0.0
        %748 = vmatmul.mubr.f32.gmra.mrb[0].mxu0 %v675
        %v749 = vpop.f32.mrb[0].mxu0
        %v750 = vadd.f32 0.0, %v749
        %v751 = vpop.f32.mrb[0].mxu0
        %752 = vmatprep.mubr.f32.mxu0 0.0
        %753 = vmatmul.mubr.f32.gmra.mrb[0].mxu0 %v678
        %v754 = vpop.f32.mrb[0].mxu0
        %v755 = vadd.f32 0.0, %v754
        %v756 = vpop.f32.mrb[0].mxu0
        %757 = vdwg.mxu0
        %758 = vmax.xlane.f32.xlu0 %v750
        %v759 = vpop.xlane.xlu0 %758
        %760 = vmax.xlane.f32.xlu0 %v755
        %v761 = vpop.xlane.xlu0 %760
        %vm762 = vcmp.ge.f32.partialorder %v750, %v759
        %vm763 = vcmp.ge.f32.partialorder %v755, %v761
        %v764 = vsel %vm762, %v403, 128
        %v765 = vsel %vm763, %v403, 128
        %v766 = vand.u32 %v764, 65535
        %v767 = vshra.s32 %v764, 16
        %v768 = vcvt.s32.f32 %v766
        %v769 = vcvt.s32.f32 %v767
        %770 = vmin.xlane.f32.xlu0 %v769
        %v771 = vpop.xlane.xlu0 %770
        %vm772 = vcmp.eq.f32.partialorder %v769, %v771
        %v773 = vsel %vm772, %v768, inf
        %774 = vmin.xlane.f32.xlu0 %v773
        %v775 = vpop.xlane.xlu0 %774
        %v776 = vcvt.f32.s32 %v775
        %v777 = vcvt.f32.s32 %v771
        %v778 = vshll.u32 %v777, 16
        %v779 = vadd.s32 %v778, %v776
        %v780 = vand.u32 %v765, 65535
        %v781 = vshra.s32 %v765, 16
        %v782 = vcvt.s32.f32 %v780
        %v783 = vcvt.s32.f32 %v781
        %784 = vmin.xlane.f32.xlu0 %v783
        %v785 = vpop.xlane.xlu0 %784
        %vm786 = vcmp.eq.f32.partialorder %v783, %v785
        %v787 = vsel %vm786, %v782, inf
        %788 = vmin.xlane.f32.xlu0 %v787
        %v789 = vpop.xlane.xlu0 %788
        %v790 = vcvt.f32.s32 %v789
        %v791 = vcvt.f32.s32 %v785
        %v792 = vshll.u32 %v791, 16
        %v793 = vadd.s32 %v792, %v790
        %vm794 = vcmp.eq.s32.totalorder %v764, %v779
        %vm795 = vcmp.eq.s32.totalorder %v765, %v793
        %v796 = vsel %vm794, 1, 0
        %v797 = vsel %vm795, 1, 0
        %v798 = vcvt.s32.f32 %v796
        %v799 = vcvt.s32.f32 %v797
        %s800 = scalar_lea.vmem %s293, 128 [#allocation8]
        %v801 = vld [vmem:[%s800] sm:$0xff]
        %v802 = vld [vmem:[%s800 + $0x8] sm:$0xff]
        %v803 = vld [vmem:[%s800 + $0x10] sm:$0xff]
        %v804 = vld [vmem:[%s800 + $0x18] sm:$0xff]
        %v805 = vld [vmem:[%s800 + $0x20] sm:$0xff]
        %v806 = vld [vmem:[%s800 + $0x28] sm:$0xff]
        %v807 = vld [vmem:[%s800 + $0x30] sm:$0xff]
        %v808 = vld [vmem:[%s800 + $0x38] sm:$0xff]
        %v809 = vld [vmem:[%s800 + $0x40] sm:$0xff]
        %v810 = vld [vmem:[%s800 + $0x48] sm:$0xff]
        %v811 = vld [vmem:[%s800 + $0x50] sm:$0xff]
        %v812 = vld [vmem:[%s800 + $0x58] sm:$0xff]
        %v813 = vld [vmem:[%s800 + $0x60] sm:$0xff]
        %v814 = vld [vmem:[%s800 + $0x68] sm:$0xff]
        %v815 = vld [vmem:[%s800 + $0x70] sm:$0xff]
        %v816 = vld [vmem:[%s800 + $0x78] sm:$0xff]
        %817 = vmatprep.subr.mxu0 0.0
        %818 = vmatpush1.msra.mxu0 %v801
        %819 = vmatprep.subr.mxu0 0.0
        %820 = vmatpush1.msra.mxu0 %v802
        %821 = vmatprep.subr.mxu0 0.0
        %822 = vmatpush1.msra.mxu0 %v803
        %823 = vmatprep.subr.mxu0 0.0
        %824 = vmatpush1.msra.mxu0 %v804
        %825 = vmatprep.subr.mxu0 0.0
        %826 = vmatpush1.msra.mxu0 %v805
        %827 = vmatprep.subr.mxu0 0.0
        %828 = vmatpush1.msra.mxu0 %v806
        %829 = vmatprep.subr.mxu0 0.0
        %830 = vmatpush1.msra.mxu0 %v807
        %831 = vmatprep.subr.mxu0 0.0
        %832 = vmatpush1.msra.mxu0 %v808
        %833 = vmatprep.subr.mxu0 0.0
        %834 = vmatpush1.msra.mxu0 %v809
        %835 = vmatprep.subr.mxu0 0.0
        %836 = vmatpush1.msra.mxu0 %v810
        %837 = vmatprep.subr.mxu0 0.0
        %838 = vmatpush1.msra.mxu0 %v811
        %839 = vmatprep.subr.mxu0 0.0
        %840 = vmatpush1.msra.mxu0 %v812
        %841 = vmatprep.subr.mxu0 0.0
        %842 = vmatpush1.msra.mxu0 %v813
        %843 = vmatprep.subr.mxu0 0.0
        %844 = vmatpush1.msra.mxu0 %v814
        %845 = vmatprep.subr.mxu0 0.0
        %846 = vmatpush1.msra.mxu0 %v815
        %847 = vmatprep.subr.mxu0 0.0
        %848 = vmatpush1.msra.mxu0 %v816
        %849 = vmatprep.subr.mxu0 0.0
        %850 = vmatpush1.msra.mxu0 0.0
        %851 = vmatprep.subr.mxu0 0.0
        %852 = vmatpush1.msra.mxu0 0.0
        %853 = vmatprep.subr.mxu0 0.0
        %854 = vmatpush1.msra.mxu0 0.0
        %855 = vmatprep.subr.mxu0 0.0
        %856 = vmatpush1.msra.mxu0 0.0
        %857 = vmatprep.subr.mxu0 0.0
        %858 = vmatpush1.msra.mxu0 0.0
        %859 = vmatprep.subr.mxu0 0.0
        %860 = vmatpush1.msra.mxu0 0.0
        %861 = vmatprep.subr.mxu0 0.0
        %862 = vmatpush1.msra.mxu0 0.0
        %863 = vmatprep.subr.mxu0 0.0
        %864 = vmatpush1.msra.mxu0 0.0
        %865 = vmatprep.subr.mxu0 0.0
        %866 = vmatpush1.msra.mxu0 0.0
        %867 = vmatprep.subr.mxu0 0.0
        %868 = vmatpush1.msra.mxu0 0.0
        %869 = vmatprep.subr.mxu0 0.0
        %870 = vmatpush1.msra.mxu0 0.0
        %871 = vmatprep.subr.mxu0 0.0
        %872 = vmatpush1.msra.mxu0 0.0
        %873 = vmatprep.subr.mxu0 0.0
        %874 = vmatpush1.msra.mxu0 0.0
        %875 = vmatprep.subr.mxu0 0.0
        %876 = vmatpush1.msra.mxu0 0.0
        %877 = vmatprep.subr.mxu0 0.0
        %878 = vmatpush1.msra.mxu0 0.0
        %879 = vmatprep.subr.mxu0 0.0
        %880 = vmatpush1.msra.mxu0 0.0
        %881 = vmatprep.mubr.f32.mxu0 0.0
        %882 = vmatmul.mubr.f32.gmra.mrb[0].mxu0 %v798
        %v883 = vpop.f32.mrb[0].mxu0
        %v884 = vadd.f32 0.0, %v883
        %v885 = vpop.f32.mrb[0].mxu0
        %886 = vmatprep.mubr.f32.mxu0 0.0
        %887 = vmatmul.mubr.f32.gmra.mrb[0].mxu0 %v799
        %v888 = vpop.f32.mrb[0].mxu0
        %v889 = vadd.f32 0.0, %v888
        %v890 = vpop.f32.mrb[0].mxu0
        %891 = vdwg.mxu0
        %v892 = vld [vmem:[#allocation2 + $0x1] sm:$0x1]
        %v893 = vmul.f32 %v759, 2.0
        %v894 = vmul.f32 %v761, 2.0
        %v897 = vlaneseq
        %v898 = vshrl.u32 %v897, 7
        %v899 = vsub.s32 %v403, %v898
        %v900 = vrot.slane %v893, %v899
        %v901 = vlaneseq
        %v902 = vshrl.u32 %v901, 7
        %v903 = vsub.s32 %v638, %v902
        %v904 = vrot.slane %v894, %v903
        %v905 = vsel %vm643, %v904, %v900
        %v907 = vsub.f32 %v892, %v905
        %v908 = vlaneseq
        %v909 = vshrl.u32 %v908, 7
        %v910 = vsub.s32 %v403, %v909
        %v911 = vrot.slane %v779, %v910
        %v912 = vlaneseq
        %v913 = vshrl.u32 %v912, 7
        %v914 = vsub.s32 %v638, %v913
        %v915 = vrot.slane %v793, %v914
        %v916 = vsel %vm643, %v915, %v911
        %917 = vst.msk [vmem:[%s322 + $0x1] sm:$0x1] %vm656, %v916
        %918 = vst.msk [vmem:[%s329 + $0x1] sm:$0x1] %vm656, %v907
        %919 = vst.msk [vmem:[#allocation2 + $0x1] sm:$0x1] %vm656, %v907
        %922 = vrot.lane.b32.xlu0 %v884, 16
        %v923 = vpop.permute.xlu0 %922
        %924 = vrot.lane.b32.xlu0 %v889, 16
        %v925 = vpop.permute.xlu0 %924
        %v928 = vsel %vm404, %v621, %v923
        %v929 = vsel %vm404, %v626, %v925
        %v930 = vadd.f32 %v341, %v928
        %v931 = vadd.f32 %v342, %v929
        %vm932 = vcmask 261120
        %933 = vst.msk [vmem:[#allocation9] sm:$0xff] %vm932, %v930
        %934 = vst.msk [vmem:[#allocation9 + $0x8] sm:$0xff] %vm932, %v931
        %s935 = sand.u32 %s25, 1
        %s936 = scalar_lea.sflag [#allocation11], %s935
        %s937 = sand.u32 %s151, 1
        %s938 = smul.addr %s937, 2
        %s939 = scalar_lea.vmem [#allocation10], %s938
        %s940 = sand.u32 %s25, 1
        %s941 = scalar_lea.sflag [#allocation11], %s940
        %s942 = sand.u32 %s179, 1
        %s943 = smul.addr %s942, 2
        %s944 = scalar_lea.vmem [#allocation12], %s943
        // Predicated region
        $region53: #{tpu_custom_call.1} parent=31 // pred_check
          %p945 = pneg %p133
        $region54: #{tpu_custom_call.1} parent=31 // pred_check_branch
          %947 = sbr.rel (%p945) target = $region56
        $region55: #{tpu_custom_call.1} parent=31 // pred_region
          %s948 = smul.u32 2, %s29
          %s950 = ssub.s32 256, 256
          %951 = vsyncadd [#allocation5], %s950
          %s952 = smul.addr %s948, 128
          %s953 = scalar_lea.hbm %s3, %s952
          %s954 = sshll.u32 [#allocation9], 4
          %s955 = int_to_ptr.vmem [resolvable:$true] %s954
          %960 = dma.vmem_to_hbm [thread:$0]  %s955, 256, %s953, [#allocation5], 128, 128, 8
        $region56: #{tpu_custom_call.1} parent=31 // pred_fallthru
          _
        // Predicated region
        $region57: #{tpu_custom_call.1} parent=31 // pred_check
          %p961 = pneg %p161
        $region58: #{tpu_custom_call.1} parent=31 // pred_check_branch
          %963 = sbr.rel (%p961) target = $region60
        $region59: #{tpu_custom_call.1} parent=31 // pred_region
          %s965 = ssub.s32 32, 32
          %966 = vsyncadd %s936, %s965
          %s967 = sadd.s32 %s29, %s30
          %s968 = smul.addr %s967, 32
          %s969 = scalar_lea.hbm %s4, %s968
          %s971 = sshll.u32 %s939, 4
          %s972 = int_to_ptr.vmem [resolvable:$true] %s971
          %974 = dma.vmem_to_hbm [thread:$0]  %s972, 32, %s969, %s936
        $region60: #{tpu_custom_call.1} parent=31 // pred_fallthru
          _
        // Predicated region
        $region61: #{tpu_custom_call.1} parent=31 // pred_check
          %p975 = pneg %p189
        $region62: #{tpu_custom_call.1} parent=31 // pred_check_branch
          %977 = sbr.rel (%p975) target = $region64
        $region63: #{tpu_custom_call.1} parent=31 // pred_region
          %s979 = ssub.s32 32, 32
          %980 = vsyncadd %s941, %s979
          %s981 = sadd.s32 %s29, %s30
          %s982 = smul.addr %s981, 32
          %s983 = scalar_lea.hbm %s5, %s982
          %s985 = sshll.u32 %s944, 4
          %s986 = int_to_ptr.vmem [resolvable:$true] %s985
          %988 = dma.vmem_to_hbm [thread:$0]  %s986, 32, %s983, %s941
        $region64: #{tpu_custom_call.1} parent=31 // pred_fallthru
          _
        // Predicated region
        $region65: #{tpu_custom_call.1} parent=31 // pred_check
          %p989 = pneg %p133
        $region66: #{tpu_custom_call.1} parent=31 // pred_check_branch
          %991 = sbr.rel (%p989) target = $region68
        $region67: #{tpu_custom_call.1} parent=31 // pred_region
          %992 = dma.done [#allocation5], 256
        $region68: #{tpu_custom_call.1} parent=31 // pred_fallthru
          _
      $region32: #{tpu_custom_call.1} parent=5 // pred_fallthru
        _
      %p993 = scmp.le.s32.totalorder 2, %s20
      // Predicated region
      $region69: #{tpu_custom_call.1} parent=5 // pred_check
        %p994 = pneg %p993
      $region70: #{tpu_custom_call.1} parent=5 // pred_check_branch
        %996 = sbr.rel (%p994) target = $region72
      $region71: #{tpu_custom_call.1} parent=5 // pred_region
        %s997 = ssub.s32 %s20, 2
        // Predicated region
        $region73: #{tpu_custom_call.1} parent=71 // pred_check
          %p998 = pneg %p167
        $region74: #{tpu_custom_call.1} parent=71 // pred_check_branch
          %1000 = sbr.rel (%p998) target = $region76
        $region75: #{tpu_custom_call.1} parent=71 // pred_region
          %s1001 = sand.u32 %s26, 1
          %s1002 = scalar_lea.sflag [#allocation11], %s1001
          %s1003 = sand.u32 %s152, 1
          %s1004 = smul.addr %s1003, 2
          %s1005 = scalar_lea.vmem [#allocation10], %s1004
          %1006 = dma.done %s1002, 32
        $region76: #{tpu_custom_call.1} parent=71 // pred_fallthru
          _
        // Predicated region
        $region77: #{tpu_custom_call.1} parent=71 // pred_check
          %p1007 = pneg %p195
        $region78: #{tpu_custom_call.1} parent=71 // pred_check_branch
          %1009 = sbr.rel (%p1007) target = $region80
        $region79: #{tpu_custom_call.1} parent=71 // pred_region
          %s1010 = sand.u32 %s26, 1
          %s1011 = scalar_lea.sflag [#allocation11], %s1010
          %s1012 = sand.u32 %s180, 1
          %s1013 = smul.addr %s1012, 2
          %s1014 = scalar_lea.vmem [#allocation12], %s1013
          %1015 = dma.done %s1011, 32
        $region80: #{tpu_custom_call.1} parent=71 // pred_fallthru
          _
      $region72: #{tpu_custom_call.1} parent=5 // pred_fallthru
        _
    $region6: #{tpu_custom_call.1} parent=1 // loop_footer
      %s24 = sadd.s32 1, %s20
    $region7: #{tpu_custom_call.1} parent=1 // loop_footer_branch
      %19 = sbr.rel target = $region3
    $region8: #{tpu_custom_call.1} parent=1 // loop_exit
      _
    %1016 = vsyncpa [#allocation4], 1
    %s1017 = scalar_lea.sflag [#allocation4], 1
    %1018 = vsyncpa %s1017, 1
    %1019 = vsyncpa [#allocation7], 1
    %s1020 = scalar_lea.sflag [#allocation7], 1
    %1021 = vsyncpa %s1020, 1
    %1022 = vsyncpa [#allocation5], 1
    %s1023 = scalar_lea.sflag [#allocation5], 1
    %1024 = vsyncpa %s1023, 1
    %1025 = vsyncpa [#allocation11], 1
    %s1026 = scalar_lea.sflag [#allocation11], 1
    %1027 = vsyncpa %s1026, 1

</llo_original>
